<compile_context>
chip_gen: v7x
topology: tpu7x:2x2x1
jax: 0.10.0
libtpu: 0.0.40
codegen_flags: <defaults>
</compile_context>

<pallas_src>
from functools import partial
from typing import Tuple

import numpy as np
import jax
import jax.numpy as jnp
from jax.experimental import pallas as pl
from jax.experimental.pallas import tpu as pltpu


# ----------------------------------------------------------------------------
# Gaussian kernel construction (matches kornia.filters.kernels.gaussian)
# ----------------------------------------------------------------------------
def _gaussian_kernel1d(ksize: int, sigma: float) -> np.ndarray:
    x = np.arange(ksize, dtype=np.float64) - ksize // 2
    if ksize % 2 == 0:
        x = x + 0.5
    g = np.exp(-(x ** 2) / (2.0 * sigma ** 2))
    return (g / g.sum()).astype(np.float64)


# ----------------------------------------------------------------------------
# Shifted views with border handling.
#   y[..., i, ...] = x[..., border(i + shift), ...] along `axis` (-2 or -1).
# ----------------------------------------------------------------------------
def _roll_shift(x, shift: int, axis: int, size: int, border_type: str):
    """XLU roll of the whole tile + fixup of |shift| boundary rows/cols."""
    ax = x.ndim + axis if axis < 0 else axis
    rolled = pltpu.roll(x, shift=(-shift) % size, axis=ax)
    if border_type == "circular":
        return rolled

    d = abs(shift)
    iota_shape = tuple(size if a == ax else 1 for a in range(x.ndim))
    pos = jax.lax.broadcasted_iota(jnp.int32, iota_shape, ax)

    def line(q):
        idx = tuple(slice(q, q + 1) if a == ax else slice(None)
                    for a in range(x.ndim))
        return x[idx]

    if border_type == "constant":
        bad = (pos >= size - d) if shift > 0 else (pos < d)
        return jnp.where(bad, 0.0, rolled)

    if border_type == "replicate":
        q = size - 1 if shift > 0 else 0
        bad = (pos >= size - d) if shift > 0 else (pos < d)
        return jnp.where(bad, line(q), rolled)

    # 'reflect' (torch-style; edge sample not repeated)
    out = rolled
    for j in range(d):
        if shift > 0:
            p = size - d + j
            q = 2 * (size - 1) - (p + shift)
        else:
            p = j
            q = d - j
        out = jnp.where(pos == p, line(q), out)
    return out


def _shift_with_border(x, shift: int, axis: int, size: int, border_type: str):
    """Fallback path: static slices + concat (works for any tile alignment)."""
    if shift == 0:
        return x

    def sl(lo, hi):
        if axis == -2:
            return x[:, lo:hi, :]
        return x[:, :, lo:hi]

    d = abs(shift)
    if border_type == "constant":
        fill = jnp.zeros_like(sl(0, d))
    elif border_type == "replicate":
        edge = sl(size - 1, size) if shift > 0 else sl(0, 1)
        fill = jnp.concatenate([edge] * d, axis=axis) if d > 1 else edge
    elif border_type == "circular":
        fill = sl(0, d) if shift > 0 else sl(size - d, size)
    else:  # 'reflect'
        if shift > 0:
            idxs = [size - 1 - e for e in range(1, d + 1)]
        else:
            idxs = [d - r for r in range(d)]
        cols = [sl(i, i + 1) for i in idxs]
        fill = jnp.concatenate(cols, axis=axis) if len(cols) > 1 else cols[0]

    if shift > 0:
        return jnp.concatenate([sl(d, size), fill], axis=axis)
    return jnp.concatenate([fill, sl(0, size - d)], axis=axis)


def _shifted(x, shift, axis, size, border_type, use_roll):
    if use_roll:
        return _roll_shift(x, shift, axis, size, border_type)
    return _shift_with_border(x, shift, axis, size, border_type)


# ----------------------------------------------------------------------------
# Pallas kernel: one (TC, H, W) group of channel planes per grid step.
# ----------------------------------------------------------------------------
def _unsharp_kernel(x_ref, o_ref, *, wy, wx, border_type):
    x = x_ref[...]                       # (TC, H, W), input dtype
    _, H, W = x.shape
    py, px = len(wy) // 2, len(wx) // 2

    xf = x.astype(jnp.float32)           # cast once; all taps shift xf / v

    roll_h = (H % 8 == 0)                # sublane-axis roll is tile-aligned
    roll_w = (W % 128 == 0)              # lane-axis roll is tile-aligned

    # Vertical (sublane axis) separable pass -> f32 accumulator.
    v = wy[py] * xf
    for t, dy in enumerate(range(-py, py + 1)):
        if dy == 0:
            continue
        v = v + wy[t] * _shifted(xf, dy, -2, H, border_type, roll_h)

    # Horizontal (lane axis) separable pass.
    blur = wx[px] * v
    for t, dx in enumerate(range(-px, px + 1)):
        if dx == 0:
            continue
        blur = blur + wx[t] * _shifted(v, dx, -1, W, border_type, roll_w)

    # Sharpen: x + (x - blur) = 2x - blur, cast back to input dtype.
    o_ref[...] = (2.0 * xf - blur).astype(o_ref.dtype)


# ----------------------------------------------------------------------------
# Wrapper
# ----------------------------------------------------------------------------
def unsharp_mask(x: jax.Array,
                 kernel_size: Tuple[int, int] = (3, 3),
                 sigma: Tuple[float, float] = (1.5, 1.5),
                 border_type: str = "reflect") -> jax.Array:
    """UnsharpMask forward. x: (B, C, H, W)."""
    assert x.ndim == 4, "expected NCHW input"
    B, C, H, W = x.shape
    ky, kx = kernel_size
    assert ky % 2 == 1 and kx % 2 == 1, "only odd kernel sizes supported"
    assert border_type in ("reflect", "replicate", "circular", "constant")
    assert H > ky // 2 and W > kx // 2, "spatial dims too small for kernel"

    wy = tuple(float(w) for w in _gaussian_kernel1d(ky, float(sigma[0])))
    wx = tuple(float(w) for w in _gaussian_kernel1d(kx, float(sigma[1])))

    N = B * C
    xr = x.reshape(N, H, W)
    itemsize = jnp.dtype(x.dtype).itemsize

    # --- generation-aware VMEM budget -------------------------------------
    try:
        vmem_cap = int(pltpu.get_tpu_info().vmem_capacity_bytes)
    except Exception:
        vmem_cap = 128 * 1024 * 1024
    # v5e/v6e (128 MiB physical) -> 64 MiB; v7x (64 MiB/TC) -> 48 MiB.
    vmem_limit = max(16 * 1024 * 1024, min(64 * 1024 * 1024, (vmem_cap * 3) // 4))

    try:
        two_cores = "v7" in jax.devices()[0].device_kind.lower()
    except Exception:
        two_cores = False

    # Block footprint budget: ~2x double-buffered in + 2x out (input dtype)
    # plus ~4-5 live full-tile f32 temps  ->  keep block ~= vmem_limit / 10
    # (multi-MiB blocks, not the old 512 KiB cap).
    plane_f32_bytes = H * W * 4
    block_budget = vmem_limit // 10
    tc = int(max(1, min(N, block_budget // plane_f32_bytes)))
    grid_n = pl.cdiv(N, tc)
    if two_cores and grid_n < 2 and N >= 2:
        # Keep both TensorCores busy on 2-TC chips.
        tc = pl.cdiv(N, 2)
        grid_n = pl.cdiv(N, tc)

    kernel_fn = partial(_unsharp_kernel, wy=wy, wx=wx, border_type=border_type)

    flops = (2 * (ky + kx) + 2) * N * H * W
    bytes_accessed = 2 * N * H * W * itemsize

    out = pl.pallas_call(
        kernel_fn,
        out_shape=jax.ShapeDtypeStruct((N, H, W), x.dtype),
        grid=(grid_n,),
        in_specs=[pl.BlockSpec((tc, H, W), lambda i: (i, 0, 0))],
        out_specs=pl.BlockSpec((tc, H, W), lambda i: (i, 0, 0)),
        compiler_params=pltpu.CompilerParams(
            dimension_semantics=("parallel",),
            vmem_limit_bytes=int(vmem_limit)),
        cost_estimate=pl.CostEstimate(
            flops=flops, transcendentals=0, bytes_accessed=bytes_accessed),
    )(xr)
    return out.reshape(B, C, H, W)


class UnsharpMask:
    """JAX/Pallas equivalent of kornia UnsharpMask module."""

    def __init__(self, kernel_size: Tuple[int, int],
                 sigma: Tuple[float, float],
                 border_type: str = "reflect") -> None:
        self.kernel_size = kernel_size
        self.sigma = sigma
        self.border_type = border_type

    def __call__(self, x: jax.Array) -> jax.Array:
        return unsharp_mask(x, self.kernel_size, self.sigma, self.border_type)


# ----------------------------------------------------------------------------
# Pure-JAX reference (independent 2D formulation) for a sanity check.
# ----------------------------------------------------------------------------
def _reference(x, kernel_size, sigma, border_type="reflect"):
    ky, kx = kernel_size
    gy = _gaussian_kernel1d(ky, float(sigma[0]))
    gx = _gaussian_kernel1d(kx, float(sigma[1]))
    kernel2d = jnp.asarray(np.outer(gy, gx).astype(np.float32))
    pad_y, pad_x = (ky - 1) // 2, (kx - 1) // 2
    mode_map = {"reflect": "reflect", "replicate": "edge",
                "circular": "wrap", "constant": "constant"}
    xpad = jnp.pad(x, ((0, 0), (0, 0), (pad_y, pad_y), (pad_x, pad_x)),
                   mode=mode_map[border_type]).astype(jnp.float32)
    B, C, H, W = x.shape
    blur = jnp.zeros((B, C, H, W), jnp.float32)
    for i in range(ky):
        for j in range(kx):
            blur = blur + kernel2d[i, j] * xpad[:, :, i:i + H, j:j + W]
    return (2.0 * x.astype(jnp.float32) - blur).astype(x.dtype)


if __name__ == "__main__":
    key = jax.random.PRNGKey(0)

    # 1) Canonical small NCHW test (matches the module example).
    B, C, H, W = 2, 4, 16, 16
    x = jax.random.uniform(key, (B, C, H, W), dtype=jnp.float32)
    sharpen = UnsharpMask((3, 3), (1.5, 1.5))
    out = jax.block_until_ready(sharpen(x))
    assert out.shape == (B, C, H, W) and out.dtype == x.dtype
    ref = _reference(x, (3, 3), (1.5, 1.5))
    np.testing.assert_allclose(np.asarray(out), np.asarray(ref),
                               rtol=1e-5, atol=1e-5)

    # 2) Lane-/sublane-aligned shape exercising the pltpu.roll fast path
    #    (W % 128 == 0, H % 8 == 0) with a 5x5 kernel (multi-row fixup).
    x2 = jax.random.uniform(jax.random.fold_in(key, 1), (1, 3, 32, 256),
                            dtype=jnp.float32)
    out2 = jax.block_until_ready(unsharp_mask(x2, (5, 5), (1.2, 2.0),
                                              border_type="reflect"))
    ref2 = _reference(x2, (5, 5), (1.2, 2.0), border_type="reflect")
    np.testing.assert_allclose(np.asarray(out2), np.asarray(ref2),
                               rtol=1e-5, atol=1e-5)

    print("KERNEL_OK")
</pallas_src>

<mosaic_0001>
module attributes {stable_mosaic.version = 11 : i64} {
  func.func @_unsharp_kernel(%arg0: i32, %arg1: memref<8x16x16xf32, #tpu.memory_space<vmem>>, %arg2: memref<8x16x16xf32, #tpu.memory_space<vmem>>) attributes {dimension_semantics = [#tpu.dimension_semantics<parallel>], iteration_bounds = array<i64: 1>, scalar_prefetch = 0 : i64, scratch_operands = 0 : i64, tpu.core_type = #tpu.core_type<tc>, window_params = [{transform_indices = @transform_0, window_bounds = array<i64: 8, 16, 16>}, {transform_indices = @transform_1, window_bounds = array<i64: 8, 16, 16>}]} {
    %c0 = arith.constant 0 : index
    %c0_0 = arith.constant 0 : index
    %c0_1 = arith.constant 0 : index
    %0 = vector.load %arg1[%c0, %c0_0, %c0_1] : memref<8x16x16xf32, #tpu.memory_space<vmem>>, vector<8x16x16xf32>
    %cst = arith.constant 0.384397328 : f32
    %1 = vector.broadcast %cst : f32 to vector<8x16x16xf32>
    %2 = arith.mulf %1, %0 : vector<8x16x16xf32>
    %c1_i32 = arith.constant 1 : i32
    %3 = tpu.dynamic_rotate %0 by %c1_i32 dim 1 : vector<8x16x16xf32>, i32 -> vector<8x16x16xf32>
    %4 = tpu.iota {dimensions = array<i32: 1>} : vector<1x16x1xi32>
    %c0_i32 = arith.constant 0 : i32
    %5 = vector.broadcast %c0_i32 : i32 to vector<1x16x1xi32>
    %6 = arith.cmpi eq, %4, %5 : vector<1x16x1xi32>
    %7 = vector.extract_strided_slice %0 {offsets = [0, 1, 0], sizes = [8, 1, 16], strides = [1, 1, 1]} : vector<8x16x16xf32> to vector<8x1x16xf32>
    %8 = vector.shape_cast %6 : vector<1x16x1xi1> to vector<1x16x1xi1>
    %9 = vector.broadcast %8 : vector<1x16x1xi1> to vector<8x16x16xi1>
    %10 = vector.shape_cast %7 : vector<8x1x16xf32> to vector<8x1x16xf32>
    %11 = vector.broadcast %10 : vector<8x1x16xf32> to vector<8x16x16xf32>
    %12 = arith.select %9, %11, %3 : vector<8x16x16xi1>, vector<8x16x16xf32>
    %cst_2 = arith.constant 0.307801336 : f32
    %13 = vector.broadcast %cst_2 : f32 to vector<8x16x16xf32>
    %14 = arith.mulf %13, %12 : vector<8x16x16xf32>
    %15 = arith.addf %2, %14 : vector<8x16x16xf32>
    %c15_i32 = arith.constant 15 : i32
    %16 = tpu.dynamic_rotate %0 by %c15_i32 dim 1 : vector<8x16x16xf32>, i32 -> vector<8x16x16xf32>
    %17 = tpu.iota {dimensions = array<i32: 1>} : vector<1x16x1xi32>
    %c15_i32_3 = arith.constant 15 : i32
    %18 = vector.broadcast %c15_i32_3 : i32 to vector<1x16x1xi32>
    %19 = arith.cmpi eq, %17, %18 : vector<1x16x1xi32>
    %20 = vector.extract_strided_slice %0 {offsets = [0, 14, 0], sizes = [8, 1, 16], strides = [1, 1, 1]} : vector<8x16x16xf32> to vector<8x1x16xf32>
    %21 = vector.shape_cast %19 : vector<1x16x1xi1> to vector<1x16x1xi1>
    %22 = vector.broadcast %21 : vector<1x16x1xi1> to vector<8x16x16xi1>
    %23 = vector.shape_cast %20 : vector<8x1x16xf32> to vector<8x1x16xf32>
    %24 = vector.broadcast %23 : vector<8x1x16xf32> to vector<8x16x16xf32>
    %25 = arith.select %22, %24, %16 : vector<8x16x16xi1>, vector<8x16x16xf32>
    %cst_4 = arith.constant 0.307801336 : f32
    %26 = vector.broadcast %cst_4 : f32 to vector<8x16x16xf32>
    %27 = arith.mulf %26, %25 : vector<8x16x16xf32>
    %28 = arith.addf %15, %27 : vector<8x16x16xf32>
    %cst_5 = arith.constant 0.384397328 : f32
    %29 = vector.broadcast %cst_5 : f32 to vector<8x16x16xf32>
    %30 = arith.mulf %29, %28 : vector<8x16x16xf32>
    %31 = vector.extract_strided_slice %28 {offsets = [0, 0, 1], sizes = [8, 16, 1], strides = [1, 1, 1]} : vector<8x16x16xf32> to vector<8x16x1xf32>
    %32 = vector.extract_strided_slice %28 {offsets = [0, 0, 0], sizes = [8, 16, 15], strides = [1, 1, 1]} : vector<8x16x16xf32> to vector<8x16x15xf32>
    %33 = tpu.concatenate %31, %32 in 2 : vector<8x16x1xf32>, vector<8x16x15xf32> -> vector<8x16x16xf32>
    %cst_6 = arith.constant 0.307801336 : f32
    %34 = vector.broadcast %cst_6 : f32 to vector<8x16x16xf32>
    %35 = arith.mulf %34, %33 : vector<8x16x16xf32>
    %36 = arith.addf %30, %35 : vector<8x16x16xf32>
    %37 = vector.extract_strided_slice %28 {offsets = [0, 0, 14], sizes = [8, 16, 1], strides = [1, 1, 1]} : vector<8x16x16xf32> to vector<8x16x1xf32>
    %38 = vector.extract_strided_slice %28 {offsets = [0, 0, 1], sizes = [8, 16, 15], strides = [1, 1, 1]} : vector<8x16x16xf32> to vector<8x16x15xf32>
    %39 = tpu.concatenate %38, %37 in 2 : vector<8x16x15xf32>, vector<8x16x1xf32> -> vector<8x16x16xf32>
    %cst_7 = arith.constant 0.307801336 : f32
    %40 = vector.broadcast %cst_7 : f32 to vector<8x16x16xf32>
    %41 = arith.mulf %40, %39 : vector<8x16x16xf32>
    %42 = arith.addf %36, %41 : vector<8x16x16xf32>
    %cst_8 = arith.constant 2.000000e+00 : f32
    %43 = vector.broadcast %cst_8 : f32 to vector<8x16x16xf32>
    %44 = arith.mulf %43, %0 : vector<8x16x16xf32>
    %45 = arith.subf %44, %42 : vector<8x16x16xf32>
    %c0_9 = arith.constant 0 : index
    %c0_10 = arith.constant 0 : index
    %c0_11 = arith.constant 0 : index
    %46 = vector.load %arg2[%c0_9, %c0_10, %c0_11] : memref<8x16x16xf32, #tpu.memory_space<vmem>>, vector<8x16x16xf32>
    tpu.vector_store %arg2[%c0_9, %c0_10, %c0_11], %45 {strides = array<i32>} : memref<8x16x16xf32, #tpu.memory_space<vmem>>, vector<8x16x16xf32>,
    return
  }
  func.func @transform_0(%arg0: i32) -> (i32, i32, i32) {
    %c0_i32 = arith.constant 0 : i32
    %c0_i32_0 = arith.constant 0 : i32
    %c0_i32_1 = arith.constant 0 : i32
    return %arg0, %c0_i32, %c0_i32_0 : i32, i32, i32
  }
  func.func @transform_1(%arg0: i32) -> (i32, i32, i32) {
    %c0_i32 = arith.constant 0 : i32
    %c0_i32_0 = arith.constant 0 : i32
    %c0_i32_1 = arith.constant 0 : i32
    return %arg0, %c0_i32, %c0_i32_0 : i32, i32, i32
  }
}

</mosaic_0001>

<llo_original>
// kernel: tpu_custom_call.1
$region0: #{tpu_custom_call.1}
  #allocation0 [shape = 'u32[]', space=smem, size = 0x4, offset = 0x4, fixed_abs, tag = 'smem constant byte address 0x4 - core index']
  #allocation1 [shape = 'u32[144,128]{1,0:T(1,128)}', space=vmem, size = 0x12000, scoped, tag = 'internal scratch']
  %s0 = inlined_call_operand.hbm [shape: f32[8,16,16], index: 0, kind: input, shape index: {}]
  %s1 = inlined_call_operand.hbm [shape: f32[8,16,16], index: 1, kind: output, shape index: {}]
  %s2 = sld [smem:[#allocation0]]
  $region18: #{tpu_custom_call.1} parent=0
    _
  %s4 = ssub.s32 1, %s2
  %s5 = scalar_select 0, %s4, %s2
  $region1: #{tpu_custom_call.1} parent=0
    #allocation2 [shape = 'u8[65536]{0}', space=vmem, size = 0x10000, scoped, tag = 'input window, operand 0, single buffered']
    #allocation3 [shape = 's32[1]{0}', space=sflag, size = 0x4, scoped, tag = 'scoped memory for tpu_custom_call.1']
    #allocation4 [shape = 's32[1]{0}', space=sflag, size = 0x4, scoped, tag = 'scoped memory for tpu_custom_call.1']
    #allocation5 [shape = 'u8[65536]{0}', space=vmem, size = 0x10000, scoped, tag = 'output window, operand 0, single buffered']
    %6 = vsyncpa [#allocation3], 0
    %7 = vsyncpa [#allocation4], 0
    // Predicated region
    $region2: #{tpu_custom_call.1} parent=1 // pred_check
      _
    $region3: #{tpu_custom_call.1} parent=1 // pred_check_branch
      %9 = sbr.rel (0) target = $region5
    $region4: #{tpu_custom_call.1} parent=1 // pred_region
      %s11 = ssub.s32 2048, 2048
      %12 = vsyncadd [#allocation3], %s11
      %s13 = sshll.u32 [#allocation2], 4
      %s14 = int_to_ptr.vmem [resolvable:$true] %s13
      %19 = dma.hbm_to_vmem [thread:$0]  %s0, 2048, %s14, [#allocation3], 128, 128, 8
    $region5: #{tpu_custom_call.1} parent=1 // pred_fallthru
      _
    // Predicated region
    $region6: #{tpu_custom_call.1} parent=1 // pred_check
      _
    $region7: #{tpu_custom_call.1} parent=1 // pred_check_branch
      %21 = sbr.rel (0) target = $region9
    $region8: #{tpu_custom_call.1} parent=1 // pred_region
      %22 = dma.done [#allocation3], 2048
    $region9: #{tpu_custom_call.1} parent=1 // pred_fallthru
      _
    %v23 = vld [vmem:[#allocation2] sm:$0xff]
    %v24 = vld [vmem:[#allocation2 + $0x8] sm:$0xff]
    %v25 = vld [vmem:[#allocation2 + $0x10] sm:$0xff]
    %v26 = vld [vmem:[#allocation2 + $0x18] sm:$0xff]
    %v27 = vld [vmem:[#allocation2 + $0x20] sm:$0xff]
    %v28 = vld [vmem:[#allocation2 + $0x28] sm:$0xff]
    %v29 = vld [vmem:[#allocation2 + $0x30] sm:$0xff]
    %v30 = vld [vmem:[#allocation2 + $0x38] sm:$0xff]
    %v31 = vld [vmem:[#allocation2 + $0x40] sm:$0xff]
    %v32 = vld [vmem:[#allocation2 + $0x48] sm:$0xff]
    %v33 = vld [vmem:[#allocation2 + $0x50] sm:$0xff]
    %v34 = vld [vmem:[#allocation2 + $0x58] sm:$0xff]
    %v35 = vld [vmem:[#allocation2 + $0x60] sm:$0xff]
    %v36 = vld [vmem:[#allocation2 + $0x68] sm:$0xff]
    %v37 = vld [vmem:[#allocation2 + $0x70] sm:$0xff]
    %v38 = vld [vmem:[#allocation2 + $0x78] sm:$0xff]
    %v39 = vmul.f32 %v23, 0.38439733
    %v40 = vmul.f32 %v24, 0.38439733
    %v41 = vmul.f32 %v25, 0.38439733
    %v42 = vmul.f32 %v26, 0.38439733
    %v43 = vmul.f32 %v27, 0.38439733
    %v44 = vmul.f32 %v28, 0.38439733
    %v45 = vmul.f32 %v29, 0.38439733
    %v46 = vmul.f32 %v30, 0.38439733
    %v47 = vmul.f32 %v31, 0.38439733
    %v48 = vmul.f32 %v32, 0.38439733
    %v49 = vmul.f32 %v33, 0.38439733
    %v50 = vmul.f32 %v34, 0.38439733
    %v51 = vmul.f32 %v35, 0.38439733
    %v52 = vmul.f32 %v36, 0.38439733
    %v53 = vmul.f32 %v37, 0.38439733
    %v54 = vmul.f32 %v38, 0.38439733
    %v55 = vrot.slane %v23, 7
    %v56 = vrot.slane %v25, 7
    %v57 = vrot.slane %v27, 7
    %v58 = vrot.slane %v29, 7
    %v59 = vrot.slane %v31, 7
    %v60 = vrot.slane %v33, 7
    %v61 = vrot.slane %v35, 7
    %v62 = vrot.slane %v37, 7
    %v63 = vrot.slane %v24, 7
    %v64 = vrot.slane %v26, 7
    %v65 = vrot.slane %v28, 7
    %v66 = vrot.slane %v30, 7
    %v67 = vrot.slane %v32, 7
    %v68 = vrot.slane %v34, 7
    %v69 = vrot.slane %v36, 7
    %v70 = vrot.slane %v38, 7
    %v71 = vlaneseq
    %v72 = vshrl.u32 %v71, 7
    %vm73 = vcmp.lt.s32.totalorder %v72, 1
    %v74 = vsel %vm73, %v55, %v63
    %v75 = vsel %vm73, %v56, %v64
    %v76 = vsel %vm73, %v57, %v65
    %v77 = vsel %vm73, %v58, %v66
    %v78 = vsel %vm73, %v59, %v67
    %v79 = vsel %vm73, %v60, %v68
    %v80 = vsel %vm73, %v61, %v69
    %v81 = vsel %vm73, %v62, %v70
    %v82 = vsel %vm73, %v63, %v55
    %v83 = vsel %vm73, %v64, %v56
    %v84 = vsel %vm73, %v65, %v57
    %v85 = vsel %vm73, %v66, %v58
    %v86 = vsel %vm73, %v67, %v59
    %v87 = vsel %vm73, %v68, %v60
    %v88 = vsel %vm73, %v69, %v61
    %v89 = vsel %vm73, %v70, %v62
    %v90 = vadd.s32 %v72, 8
    %vm91 = vcmp.eq.s32.totalorder %v72, 0
    %vm92 = vcmp.eq.s32.totalorder %v90, 0
    %v93 = vsel %vm91, 1, 0
    %v94 = vsel %vm92, 1, 0
    %vm95 = vcmp.eq.s32.totalorder %v93, 1
    %vm96 = vcmp.eq.s32.totalorder %v94, 1
    %v97 = vlaneseq
    %v98 = vshrl.u32 %v97, 7
    %v99 = vsub.s32 1, %v98
    %v100 = vrot.slane %v23, %v99
    %v101 = vlaneseq
    %v102 = vshrl.u32 %v101, 7
    %v103 = vsub.s32 1, %v102
    %v104 = vrot.slane %v25, %v103
    %v105 = vlaneseq
    %v106 = vshrl.u32 %v105, 7
    %v107 = vsub.s32 1, %v106
    %v108 = vrot.slane %v27, %v107
    %v109 = vlaneseq
    %v110 = vshrl.u32 %v109, 7
    %v111 = vsub.s32 1, %v110
    %v112 = vrot.slane %v29, %v111
    %v113 = vlaneseq
    %v114 = vshrl.u32 %v113, 7
    %v115 = vsub.s32 1, %v114
    %v116 = vrot.slane %v31, %v115
    %v117 = vlaneseq
    %v118 = vshrl.u32 %v117, 7
    %v119 = vsub.s32 1, %v118
    %v120 = vrot.slane %v33, %v119
    %v121 = vlaneseq
    %v122 = vshrl.u32 %v121, 7
    %v123 = vsub.s32 1, %v122
    %v124 = vrot.slane %v35, %v123
    %v125 = vlaneseq
    %v126 = vshrl.u32 %v125, 7
    %v127 = vsub.s32 1, %v126
    %v128 = vrot.slane %v37, %v127
    %v129 = vsel %vm95, %v100, %v82
    %v130 = vsel %vm96, %v100, %v74
    %v131 = vsel %vm95, %v104, %v83
    %v132 = vsel %vm96, %v104, %v75
    %v133 = vsel %vm95, %v108, %v84
    %v134 = vsel %vm96, %v108, %v76
    %v135 = vsel %vm95, %v112, %v85
    %v136 = vsel %vm96, %v112, %v77
    %v137 = vsel %vm95, %v116, %v86
    %v138 = vsel %vm96, %v116, %v78
    %v139 = vsel %vm95, %v120, %v87
    %v140 = vsel %vm96, %v120, %v79
    %v141 = vsel %vm95, %v124, %v88
    %v142 = vsel %vm96, %v124, %v80
    %v143 = vsel %vm95, %v128, %v89
    %v144 = vsel %vm96, %v128, %v81
    %v145 = vmul.f32 %v129, 0.30780134
    %v146 = vmul.f32 %v130, 0.30780134
    %v147 = vmul.f32 %v131, 0.30780134
    %v148 = vmul.f32 %v132, 0.30780134
    %v149 = vmul.f32 %v133, 0.30780134
    %v150 = vmul.f32 %v134, 0.30780134
    %v151 = vmul.f32 %v135, 0.30780134
    %v152 = vmul.f32 %v136, 0.30780134
    %v153 = vmul.f32 %v137, 0.30780134
    %v154 = vmul.f32 %v138, 0.30780134
    %v155 = vmul.f32 %v139, 0.30780134
    %v156 = vmul.f32 %v140, 0.30780134
    %v157 = vmul.f32 %v141, 0.30780134
    %v158 = vmul.f32 %v142, 0.30780134
    %v159 = vmul.f32 %v143, 0.30780134
    %v160 = vmul.f32 %v144, 0.30780134
    %v161 = vadd.f32 %v39, %v145
    %v162 = vadd.f32 %v40, %v146
    %v163 = vadd.f32 %v41, %v147
    %v164 = vadd.f32 %v42, %v148
    %v165 = vadd.f32 %v43, %v149
    %v166 = vadd.f32 %v44, %v150
    %v167 = vadd.f32 %v45, %v151
    %v168 = vadd.f32 %v46, %v152
    %v169 = vadd.f32 %v47, %v153
    %v170 = vadd.f32 %v48, %v154
    %v171 = vadd.f32 %v49, %v155
    %v172 = vadd.f32 %v50, %v156
    %v173 = vadd.f32 %v51, %v157
    %v174 = vadd.f32 %v52, %v158
    %v175 = vadd.f32 %v53, %v159
    %v176 = vadd.f32 %v54, %v160
    %v177 = vrot.slane %v23, 1
    %v178 = vrot.slane %v25, 1
    %v179 = vrot.slane %v27, 1
    %v180 = vrot.slane %v29, 1
    %v181 = vrot.slane %v31, 1
    %v182 = vrot.slane %v33, 1
    %v183 = vrot.slane %v35, 1
    %v184 = vrot.slane %v37, 1
    %v185 = vrot.slane %v24, 1
    %v186 = vrot.slane %v26, 1
    %v187 = vrot.slane %v28, 1
    %v188 = vrot.slane %v30, 1
    %v189 = vrot.slane %v32, 1
    %v190 = vrot.slane %v34, 1
    %v191 = vrot.slane %v36, 1
    %v192 = vrot.slane %v38, 1
    %vm193 = vcmp.lt.s32.totalorder %v72, 7
    %v194 = vsel %vm193, %v177, %v185
    %v195 = vsel %vm193, %v178, %v186
    %v196 = vsel %vm193, %v179, %v187
    %v197 = vsel %vm193, %v180, %v188
    %v198 = vsel %vm193, %v181, %v189
    %v199 = vsel %vm193, %v182, %v190
    %v200 = vsel %vm193, %v183, %v191
    %v201 = vsel %vm193, %v184, %v192
    %v202 = vsel %vm193, %v185, %v177
    %v203 = vsel %vm193, %v186, %v178
    %v204 = vsel %vm193, %v187, %v179
    %v205 = vsel %vm193, %v188, %v180
    %v206 = vsel %vm193, %v189, %v181
    %v207 = vsel %vm193, %v190, %v182
    %v208 = vsel %vm193, %v191, %v183
    %v209 = vsel %vm193, %v192, %v184
    %vm210 = vcmp.eq.s32.totalorder %v72, 15
    %vm211 = vcmp.eq.s32.totalorder %v90, 15
    %v212 = vsel %vm210, 1, 0
    %v213 = vsel %vm211, 1, 0
    %vm214 = vcmp.eq.s32.totalorder %v212, 1
    %vm215 = vcmp.eq.s32.totalorder %v213, 1
    %v216 = vlaneseq
    %v217 = vshrl.u32 %v216, 7
    %v218 = vsub.s32 6, %v217
    %v219 = vrot.slane %v24, %v218
    %v220 = vlaneseq
    %v221 = vshrl.u32 %v220, 7
    %v222 = vsub.s32 6, %v221
    %v223 = vrot.slane %v26, %v222
    %v224 = vlaneseq
    %v225 = vshrl.u32 %v224, 7
    %v226 = vsub.s32 6, %v225
    %v227 = vrot.slane %v28, %v226
    %v228 = vlaneseq
    %v229 = vshrl.u32 %v228, 7
    %v230 = vsub.s32 6, %v229
    %v231 = vrot.slane %v30, %v230
    %v232 = vlaneseq
    %v233 = vshrl.u32 %v232, 7
    %v234 = vsub.s32 6, %v233
    %v235 = vrot.slane %v32, %v234
    %v236 = vlaneseq
    %v237 = vshrl.u32 %v236, 7
    %v238 = vsub.s32 6, %v237
    %v239 = vrot.slane %v34, %v238
    %v240 = vlaneseq
    %v241 = vshrl.u32 %v240, 7
    %v242 = vsub.s32 6, %v241
    %v243 = vrot.slane %v36, %v242
    %v244 = vlaneseq
    %v245 = vshrl.u32 %v244, 7
    %v246 = vsub.s32 6, %v245
    %v247 = vrot.slane %v38, %v246
    %v248 = vsel %vm214, %v219, %v194
    %v249 = vsel %vm215, %v219, %v202
    %v250 = vsel %vm214, %v223, %v195
    %v251 = vsel %vm215, %v223, %v203
    %v252 = vsel %vm214, %v227, %v196
    %v253 = vsel %vm215, %v227, %v204
    %v254 = vsel %vm214, %v231, %v197
    %v255 = vsel %vm215, %v231, %v205
    %v256 = vsel %vm214, %v235, %v198
    %v257 = vsel %vm215, %v235, %v206
    %v258 = vsel %vm214, %v239, %v199
    %v259 = vsel %vm215, %v239, %v207
    %v260 = vsel %vm214, %v243, %v200
    %v261 = vsel %vm215, %v243, %v208
    %v262 = vsel %vm214, %v247, %v201
    %v263 = vsel %vm215, %v247, %v209
    %v264 = vmul.f32 %v248, 0.30780134
    %v265 = vmul.f32 %v249, 0.30780134
    %v266 = vmul.f32 %v250, 0.30780134
    %v267 = vmul.f32 %v251, 0.30780134
    %v268 = vmul.f32 %v252, 0.30780134
    %v269 = vmul.f32 %v253, 0.30780134
    %v270 = vmul.f32 %v254, 0.30780134
    %v271 = vmul.f32 %v255, 0.30780134
    %v272 = vmul.f32 %v256, 0.30780134
    %v273 = vmul.f32 %v257, 0.30780134
    %v274 = vmul.f32 %v258, 0.30780134
    %v275 = vmul.f32 %v259, 0.30780134
    %v276 = vmul.f32 %v260, 0.30780134
    %v277 = vmul.f32 %v261, 0.30780134
    %v278 = vmul.f32 %v262, 0.30780134
    %v279 = vmul.f32 %v263, 0.30780134
    %v280 = vadd.f32 %v161, %v264
    %v281 = vadd.f32 %v162, %v265
    %v282 = vadd.f32 %v163, %v266
    %v283 = vadd.f32 %v164, %v267
    %v284 = vadd.f32 %v165, %v268
    %v285 = vadd.f32 %v166, %v269
    %v286 = vadd.f32 %v167, %v270
    %v287 = vadd.f32 %v168, %v271
    %v288 = vadd.f32 %v169, %v272
    %v289 = vadd.f32 %v170, %v273
    %v290 = vadd.f32 %v171, %v274
    %v291 = vadd.f32 %v172, %v275
    %v292 = vadd.f32 %v173, %v276
    %v293 = vadd.f32 %v174, %v277
    %v294 = vadd.f32 %v175, %v278
    %v295 = vadd.f32 %v176, %v279
    %v296 = vmul.f32 %v280, 0.38439733
    %v297 = vmul.f32 %v281, 0.38439733
    %v298 = vmul.f32 %v282, 0.38439733
    %v299 = vmul.f32 %v283, 0.38439733
    %v300 = vmul.f32 %v284, 0.38439733
    %v301 = vmul.f32 %v285, 0.38439733
    %v302 = vmul.f32 %v286, 0.38439733
    %v303 = vmul.f32 %v287, 0.38439733
    %v304 = vmul.f32 %v288, 0.38439733
    %v305 = vmul.f32 %v289, 0.38439733
    %v306 = vmul.f32 %v290, 0.38439733
    %v307 = vmul.f32 %v291, 0.38439733
    %v308 = vmul.f32 %v292, 0.38439733
    %v309 = vmul.f32 %v293, 0.38439733
    %v310 = vmul.f32 %v294, 0.38439733
    %v311 = vmul.f32 %v295, 0.38439733
    %328 = vrot.lane.b32.xlu0 %v280, 127
    %v329 = vpop.permute.xlu0 %328
    %330 = vrot.lane.b32.xlu0 %v281, 127
    %v331 = vpop.permute.xlu0 %330
    %332 = vrot.lane.b32.xlu0 %v282, 127
    %v333 = vpop.permute.xlu0 %332
    %334 = vrot.lane.b32.xlu0 %v283, 127
    %v335 = vpop.permute.xlu0 %334
    %336 = vrot.lane.b32.xlu0 %v284, 127
    %v337 = vpop.permute.xlu0 %336
    %338 = vrot.lane.b32.xlu0 %v285, 127
    %v339 = vpop.permute.xlu0 %338
    %340 = vrot.lane.b32.xlu0 %v286, 127
    %v341 = vpop.permute.xlu0 %340
    %342 = vrot.lane.b32.xlu0 %v287, 127
    %v343 = vpop.permute.xlu0 %342
    %344 = vrot.lane.b32.xlu0 %v288, 127
    %v345 = vpop.permute.xlu0 %344
    %346 = vrot.lane.b32.xlu0 %v289, 127
    %v347 = vpop.permute.xlu0 %346
    %348 = vrot.lane.b32.xlu0 %v290, 127
    %v349 = vpop.permute.xlu0 %348
    %350 = vrot.lane.b32.xlu0 %v291, 127
    %v351 = vpop.permute.xlu0 %350
    %352 = vrot.lane.b32.xlu0 %v292, 127
    %v353 = vpop.permute.xlu0 %352
    %354 = vrot.lane.b32.xlu0 %v293, 127
    %v355 = vpop.permute.xlu0 %354
    %356 = vrot.lane.b32.xlu0 %v294, 127
    %v357 = vpop.permute.xlu0 %356
    %358 = vrot.lane.b32.xlu0 %v295, 127
    %v359 = vpop.permute.xlu0 %358
    %376 = vrot.lane.b32.xlu0 %v280, 1
    %v377 = vpop.permute.xlu0 %376
    %378 = vrot.lane.b32.xlu0 %v281, 1
    %v379 = vpop.permute.xlu0 %378
    %380 = vrot.lane.b32.xlu0 %v282, 1
    %v381 = vpop.permute.xlu0 %380
    %382 = vrot.lane.b32.xlu0 %v283, 1
    %v383 = vpop.permute.xlu0 %382
    %384 = vrot.lane.b32.xlu0 %v284, 1
    %v385 = vpop.permute.xlu0 %384
    %386 = vrot.lane.b32.xlu0 %v285, 1
    %v387 = vpop.permute.xlu0 %386
    %388 = vrot.lane.b32.xlu0 %v286, 1
    %v389 = vpop.permute.xlu0 %388
    %390 = vrot.lane.b32.xlu0 %v287, 1
    %v391 = vpop.permute.xlu0 %390
    %392 = vrot.lane.b32.xlu0 %v288, 1
    %v393 = vpop.permute.xlu0 %392
    %394 = vrot.lane.b32.xlu0 %v289, 1
    %v395 = vpop.permute.xlu0 %394
    %396 = vrot.lane.b32.xlu0 %v290, 1
    %v397 = vpop.permute.xlu0 %396
    %398 = vrot.lane.b32.xlu0 %v291, 1
    %v399 = vpop.permute.xlu0 %398
    %400 = vrot.lane.b32.xlu0 %v292, 1
    %v401 = vpop.permute.xlu0 %400
    %402 = vrot.lane.b32.xlu0 %v293, 1
    %v403 = vpop.permute.xlu0 %402
    %404 = vrot.lane.b32.xlu0 %v294, 1
    %v405 = vpop.permute.xlu0 %404
    %406 = vrot.lane.b32.xlu0 %v295, 1
    %v407 = vpop.permute.xlu0 %406
    %vm424 = vcmask 7168
    %v425 = vsel %vm424, %v329, %v377
    %v426 = vsel %vm424, %v331, %v379
    %v427 = vsel %vm424, %v333, %v381
    %v428 = vsel %vm424, %v335, %v383
    %v429 = vsel %vm424, %v337, %v385
    %v430 = vsel %vm424, %v339, %v387
    %v431 = vsel %vm424, %v341, %v389
    %v432 = vsel %vm424, %v343, %v391
    %v433 = vsel %vm424, %v345, %v393
    %v434 = vsel %vm424, %v347, %v395
    %v435 = vsel %vm424, %v349, %v397
    %v436 = vsel %vm424, %v351, %v399
    %v437 = vsel %vm424, %v353, %v401
    %v438 = vsel %vm424, %v355, %v403
    %v439 = vsel %vm424, %v357, %v405
    %v440 = vsel %vm424, %v359, %v407
    %v441 = vmul.f32 %v425, 0.30780134
    %v442 = vmul.f32 %v426, 0.30780134
    %v443 = vmul.f32 %v427, 0.30780134
    %v444 = vmul.f32 %v428, 0.30780134
    %v445 = vmul.f32 %v429, 0.30780134
    %v446 = vmul.f32 %v430, 0.30780134
    %v447 = vmul.f32 %v431, 0.30780134
    %v448 = vmul.f32 %v432, 0.30780134
    %v449 = vmul.f32 %v433, 0.30780134
    %v450 = vmul.f32 %v434, 0.30780134
    %v451 = vmul.f32 %v435, 0.30780134
    %v452 = vmul.f32 %v436, 0.30780134
    %v453 = vmul.f32 %v437, 0.30780134
    %v454 = vmul.f32 %v438, 0.30780134
    %v455 = vmul.f32 %v439, 0.30780134
    %v456 = vmul.f32 %v440, 0.30780134
    %v457 = vadd.f32 %v296, %v441
    %v458 = vadd.f32 %v297, %v442
    %v459 = vadd.f32 %v298, %v443
    %v460 = vadd.f32 %v299, %v444
    %v461 = vadd.f32 %v300, %v445
    %v462 = vadd.f32 %v301, %v446
    %v463 = vadd.f32 %v302, %v447
    %v464 = vadd.f32 %v303, %v448
    %v465 = vadd.f32 %v304, %v449
    %v466 = vadd.f32 %v305, %v450
    %v467 = vadd.f32 %v306, %v451
    %v468 = vadd.f32 %v307, %v452
    %v469 = vadd.f32 %v308, %v453
    %v470 = vadd.f32 %v309, %v454
    %v471 = vadd.f32 %v310, %v455
    %v472 = vadd.f32 %v311, %v456
    %vm473 = vcmask 121856
    %v474 = vsel %vm473, %v329, %v377
    %v475 = vsel %vm473, %v331, %v379
    %v476 = vsel %vm473, %v333, %v381
    %v477 = vsel %vm473, %v335, %v383
    %v478 = vsel %vm473, %v337, %v385
    %v479 = vsel %vm473, %v339, %v387
    %v480 = vsel %vm473, %v341, %v389
    %v481 = vsel %vm473, %v343, %v391
    %v482 = vsel %vm473, %v345, %v393
    %v483 = vsel %vm473, %v347, %v395
    %v484 = vsel %vm473, %v349, %v397
    %v485 = vsel %vm473, %v351, %v399
    %v486 = vsel %vm473, %v353, %v401
    %v487 = vsel %vm473, %v355, %v403
    %v488 = vsel %vm473, %v357, %v405
    %v489 = vsel %vm473, %v359, %v407
    %v490 = vmul.f32 %v474, 0.30780134
    %v491 = vmul.f32 %v475, 0.30780134
    %v492 = vmul.f32 %v476, 0.30780134
    %v493 = vmul.f32 %v477, 0.30780134
    %v494 = vmul.f32 %v478, 0.30780134
    %v495 = vmul.f32 %v479, 0.30780134
    %v496 = vmul.f32 %v480, 0.30780134
    %v497 = vmul.f32 %v481, 0.30780134
    %v498 = vmul.f32 %v482, 0.30780134
    %v499 = vmul.f32 %v483, 0.30780134
    %v500 = vmul.f32 %v484, 0.30780134
    %v501 = vmul.f32 %v485, 0.30780134
    %v502 = vmul.f32 %v486, 0.30780134
    %v503 = vmul.f32 %v487, 0.30780134
    %v504 = vmul.f32 %v488, 0.30780134
    %v505 = vmul.f32 %v489, 0.30780134
    %v506 = vadd.f32 %v457, %v490
    %v507 = vadd.f32 %v458, %v491
    %v508 = vadd.f32 %v459, %v492
    %v509 = vadd.f32 %v460, %v493
    %v510 = vadd.f32 %v461, %v494
    %v511 = vadd.f32 %v462, %v495
    %v512 = vadd.f32 %v463, %v496
    %v513 = vadd.f32 %v464, %v497
    %v514 = vadd.f32 %v465, %v498
    %v515 = vadd.f32 %v466, %v499
    %v516 = vadd.f32 %v467, %v500
    %v517 = vadd.f32 %v468, %v501
    %v518 = vadd.f32 %v469, %v502
    %v519 = vadd.f32 %v470, %v503
    %v520 = vadd.f32 %v471, %v504
    %v521 = vadd.f32 %v472, %v505
    %v522 = vmul.f32 %v23, 2.0
    %v523 = vmul.f32 %v24, 2.0
    %v524 = vmul.f32 %v25, 2.0
    %v525 = vmul.f32 %v26, 2.0
    %v526 = vmul.f32 %v27, 2.0
    %v527 = vmul.f32 %v28, 2.0
    %v528 = vmul.f32 %v29, 2.0
    %v529 = vmul.f32 %v30, 2.0
    %v530 = vmul.f32 %v31, 2.0
    %v531 = vmul.f32 %v32, 2.0
    %v532 = vmul.f32 %v33, 2.0
    %v533 = vmul.f32 %v34, 2.0
    %v534 = vmul.f32 %v35, 2.0
    %v535 = vmul.f32 %v36, 2.0
    %v536 = vmul.f32 %v37, 2.0
    %v537 = vmul.f32 %v38, 2.0
    %v538 = vsub.f32 %v522, %v506
    %v539 = vsub.f32 %v523, %v507
    %v540 = vsub.f32 %v524, %v508
    %v541 = vsub.f32 %v525, %v509
    %v542 = vsub.f32 %v526, %v510
    %v543 = vsub.f32 %v527, %v511
    %v544 = vsub.f32 %v528, %v512
    %v545 = vsub.f32 %v529, %v513
    %v546 = vsub.f32 %v530, %v514
    %v547 = vsub.f32 %v531, %v515
    %v548 = vsub.f32 %v532, %v516
    %v549 = vsub.f32 %v533, %v517
    %v550 = vsub.f32 %v534, %v518
    %v551 = vsub.f32 %v535, %v519
    %v552 = vsub.f32 %v536, %v520
    %v553 = vsub.f32 %v537, %v521
    %vm554 = vcmask 130048
    %555 = vst.msk [vmem:[#allocation5] sm:$0xff] %vm554, %v538
    %556 = vst.msk [vmem:[#allocation5 + $0x8] sm:$0xff] %vm554, %v539
    %557 = vst.msk [vmem:[#allocation5 + $0x10] sm:$0xff] %vm554, %v540
    %558 = vst.msk [vmem:[#allocation5 + $0x18] sm:$0xff] %vm554, %v541
    %559 = vst.msk [vmem:[#allocation5 + $0x20] sm:$0xff] %vm554, %v542
    %560 = vst.msk [vmem:[#allocation5 + $0x28] sm:$0xff] %vm554, %v543
    %561 = vst.msk [vmem:[#allocation5 + $0x30] sm:$0xff] %vm554, %v544
    %562 = vst.msk [vmem:[#allocation5 + $0x38] sm:$0xff] %vm554, %v545
    %563 = vst.msk [vmem:[#allocation5 + $0x40] sm:$0xff] %vm554, %v546
    %564 = vst.msk [vmem:[#allocation5 + $0x48] sm:$0xff] %vm554, %v547
    %565 = vst.msk [vmem:[#allocation5 + $0x50] sm:$0xff] %vm554, %v548
    %566 = vst.msk [vmem:[#allocation5 + $0x58] sm:$0xff] %vm554, %v549
    %567 = vst.msk [vmem:[#allocation5 + $0x60] sm:$0xff] %vm554, %v550
    %568 = vst.msk [vmem:[#allocation5 + $0x68] sm:$0xff] %vm554, %v551
    %569 = vst.msk [vmem:[#allocation5 + $0x70] sm:$0xff] %vm554, %v552
    %570 = vst.msk [vmem:[#allocation5 + $0x78] sm:$0xff] %vm554, %v553
    // Predicated region
    $region10: #{tpu_custom_call.1} parent=1 // pred_check
      _
    $region11: #{tpu_custom_call.1} parent=1 // pred_check_branch
      %572 = sbr.rel (0) target = $region13
    $region12: #{tpu_custom_call.1} parent=1 // pred_region
      %s574 = ssub.s32 2048, 2048
      %575 = vsyncadd [#allocation4], %s574
      %s576 = sshll.u32 [#allocation5], 4
      %s577 = int_to_ptr.vmem [resolvable:$true] %s576
      %582 = dma.vmem_to_hbm [thread:$0]  %s577, 2048, %s1, [#allocation4], 128, 128, 8
    $region13: #{tpu_custom_call.1} parent=1 // pred_fallthru
      _
    // Predicated region
    $region14: #{tpu_custom_call.1} parent=1 // pred_check
      _
    $region15: #{tpu_custom_call.1} parent=1 // pred_check_branch
      %584 = sbr.rel (0) target = $region17
    $region16: #{tpu_custom_call.1} parent=1 // pred_region
      %585 = dma.done [#allocation4], 2048
    $region17: #{tpu_custom_call.1} parent=1 // pred_fallthru
      _
    %586 = vsyncpa [#allocation3], 1
    %587 = vsyncpa [#allocation4], 1

</llo_original>
